<compile_context>
chip_gen: v6e
topology: v6e:2x2x1
jax: 0.10.0
libtpu: 0.0.40
codegen_flags: <defaults>
</compile_context>

<pallas_src>
import math

import jax
import jax.numpy as jnp
from jax.experimental import pallas as pl
from jax.experimental.pallas import tpu as pltpu


def _attention_kernel(xper_ref, kq_ref, rt_ref, a_ref, rt_out_ref):
    # Blocks carry a leading size-1 batch dim (batch lives on the grid).
    xper = xper_ref[0]            # (C, tn)  native NCW: N on lanes, C on sublanes
    kq = kq_ref[0]                # (M, C)   scale * (W_K x_cuboid)^T W_Q  (tiny)

    # scores[m, n] = sum_c kq[m, c] * x_per[c, n]  — single MXU matmul,
    # natural contraction, N stays lane-dense.
    scores = jnp.dot(kq, xper, preferred_element_type=jnp.float32)      # (M, tn)

    # torch: softmax(K @ Q, dim=1) is over the cuboid axis M; here M is the
    # sublane axis (axis 0), so this is a cheap sublane reduce.
    m_max = jnp.max(scores, axis=0, keepdims=True)                      # (1, tn)
    e = jnp.exp(scores - m_max)
    denom = jnp.sum(e, axis=0, keepdims=True)                           # (1, tn)
    r = pl.reciprocal(denom, approx=True)        # EUP slot (co-issues with VPU)
    r = r * (2.0 - denom * r)                    # one Newton step -> ~f32 accuracy
    assign = e * r                                                      # (M, tn)

    a_ref[0] = assign.astype(a_ref.dtype)

    # Fused rotate|trans epilogue: (12, M) @ (M, tn) -> (12, tn), lane-dense.
    rt_out_ref[0] = jnp.dot(rt_ref[0], assign,
                            preferred_element_type=jnp.float32
                            ).astype(rt_out_ref.dtype)


def attention_module(x_per, x_cuboid, rotate, trans, w_q, w_k, *, tile_n=None):
    B, C, N = x_per.shape
    _, _, M = x_cuboid.shape
    D = w_q.shape[0]
    scale = 1.0 / math.sqrt(D)

    # ---- tiny wrapper-side algebraic fusion -------------------------------
    # kq = scale * (W_K @ x_cuboid)^T @ W_Q   -> (B, M, C); O(B*M*C*D) flops,
    # negligible next to the x_per stream, and it lets the kernel read x_per
    # in its native NCW layout with a single matmul per tile.
    k_proj = jnp.einsum('dc,bcm->bmd', w_k, x_cuboid)            # (B, M, D)
    kq = scale * jnp.einsum('bmd,dc->bmc', k_proj, w_q)          # (B, M, C)

    # Fuse rotate (M,3,3) and trans (M,3) into one (12, M) operand so the
    # epilogue is ONE matmul and ONE lane-dense output stream.
    rt = jnp.concatenate([rotate.reshape(B, M, 9), trans], axis=-1)   # (B, M, 12)
    rt_t = jnp.transpose(rt, (0, 2, 1))                               # (B, 12, M)

    # ---- N tiling with tail handling (pad + slice, no assert) --------------
    if tile_n is None:
        tile_n = 4096            # ~2 MiB f32 / step: amortizes per-step overhead
    if N <= tile_n:
        tile_n = N               # single full-extent block (always layout-legal)
        n_pad = N
    else:
        tile_n = max(128, (tile_n // 128) * 128)     # lane-legal tile
        n_pad = ((N + tile_n - 1) // tile_n) * tile_n
    x_per_p = x_per if n_pad == N else jnp.pad(
        x_per, ((0, 0), (0, 0), (0, n_pad - N)))

    grid = (B, n_pad // tile_n)   # batch axis + N-tile axis, both "parallel"

    out_shapes = (
        jax.ShapeDtypeStruct((B, M, n_pad), jnp.float32),    # assign^T  (N on lanes)
        jax.ShapeDtypeStruct((B, 12, n_pad), jnp.float32),   # [rot|trans]^T
    )
    grid_spec = pltpu.PrefetchScalarGridSpec(
        num_scalar_prefetch=0,
        grid=grid,
        in_specs=[
            pl.BlockSpec((1, C, tile_n), lambda b, i: (b, 0, i)),   # x_per, native NCW
            pl.BlockSpec((1, M, C), lambda b, i: (b, 0, 0)),        # kq (tiny)
            pl.BlockSpec((1, 12, M), lambda b, i: (b, 0, 0)),       # fused rot|trans
        ],
        out_specs=[
            pl.BlockSpec((1, M, tile_n), lambda b, i: (b, 0, i)),
            pl.BlockSpec((1, 12, tile_n), lambda b, i: (b, 0, i)),
        ],
    )
    assign_t, rt_out = pl.pallas_call(
        _attention_kernel,
        out_shape=out_shapes,
        grid_spec=grid_spec,
        compiler_params=pltpu.CompilerParams(
            dimension_semantics=("parallel", "parallel"),
            # Safe on all generations; gives headroom for big tiles on v5e
            # (16 MiB scoped default) without exceeding v7x's 32 MiB default.
            vmem_limit_bytes=32 * 1024 * 1024,
        ),
    )(x_per_p, kq, rt_t)

    # Back to the PyTorch output layout (cheap wrapper-side plumbing).
    assign_t = assign_t[:, :, :N]
    rt_out = rt_out[:, :, :N]
    assign = jnp.transpose(assign_t, (0, 2, 1))          # (B, N, M)
    rt_out_t = jnp.transpose(rt_out, (0, 2, 1))          # (B, N, 12)
    assign_rotate = rt_out_t[:, :, :9].reshape(B, N, 3, 3)
    assign_trans = rt_out_t[:, :, 9:]
    return assign, assign_rotate, assign_trans


def _reference(x_per, x_cuboid, rotate, trans, w_q, w_k):
    D = w_q.shape[0]
    q = jnp.einsum('dc,bcn->bdn', w_q, x_per) / math.sqrt(D)     # (B, D, N)
    k = jnp.einsum('dc,bcm->bdm', w_k, x_cuboid)                 # (B, D, M)
    s = jnp.einsum('bdm,bdn->bmn', k, q)                          # (B, M, N)
    p = jax.nn.softmax(s, axis=1)                                 # softmax over M
    a = jnp.transpose(p, (0, 2, 1))                               # (B, N, M)
    rot_out = jnp.einsum('bnm,bmij->bnij', a, rotate)
    tr_out = jnp.einsum('bnm,bmk->bnk', a, trans)
    return a, rot_out, tr_out


if __name__ == "__main__":
    B, C, D = 2, 128, 32          # C=128 fixed by the module; attention_dim=32
    N, M = 16, 8                  # x_per length, number of cuboids

    key = jax.random.PRNGKey(0)
    k1, k2, k3, k4, k5, k6 = jax.random.split(key, 6)

    x_per = jax.random.normal(k1, (B, C, N), dtype=jnp.float32)
    x_cuboid = jax.random.normal(k2, (B, C, M), dtype=jnp.float32)
    rotate = jax.random.normal(k3, (B, M, 3, 3), dtype=jnp.float32)
    trans = jax.random.normal(k4, (B, M, 3), dtype=jnp.float32)

    # Conv1d(128, D, 1, bias=False) weight -> (D, 128).
    w_q = jax.random.normal(k5, (D, C), dtype=jnp.float32) * (1.0 / math.sqrt(C))
    w_k = jax.random.normal(k6, (D, C), dtype=jnp.float32) * (1.0 / math.sqrt(C))

    assign, assign_rotate, assign_trans = attention_module(
        x_per, x_cuboid, rotate, trans, w_q, w_k)
    jax.block_until_ready((assign, assign_rotate, assign_trans))

    ref_a, ref_r, ref_t = _reference(x_per, x_cuboid, rotate, trans, w_q, w_k)
    # 1e-4 tolerance: kq reassociation + Newton-refined EUP reciprocal stay ~f32.
    assert jnp.allclose(assign, ref_a, atol=1e-4, rtol=1e-4)
    assert jnp.allclose(assign_rotate, ref_r, atol=1e-4, rtol=1e-4)
    assert jnp.allclose(assign_trans, ref_t, atol=1e-4, rtol=1e-4)

    print("KERNEL_OK")
</pallas_src>

<mosaic_0001>
module attributes {stable_mosaic.version = 11 : i64} {
  func.func @_attention_kernel(%arg0: i32, %arg1: i32, %arg2: memref<1x128x16xf32, #tpu.memory_space<vmem>>, %arg3: memref<1x8x128xf32, #tpu.memory_space<vmem>>, %arg4: memref<1x12x8xf32, #tpu.memory_space<vmem>>, %arg5: memref<1x8x16xf32, #tpu.memory_space<vmem>>, %arg6: memref<1x12x16xf32, #tpu.memory_space<vmem>>) attributes {dimension_semantics = [#tpu.dimension_semantics<parallel>, #tpu.dimension_semantics<parallel>], iteration_bounds = array<i64: 2, 1>, scalar_prefetch = 0 : i64, scratch_operands = 0 : i64, tpu.core_type = #tpu.core_type<tc>, window_params = [{transform_indices = @transform_0, window_bounds = array<i64: 1, 128, 16>}, {transform_indices = @transform_1, window_bounds = array<i64: 1, 8, 128>}, {transform_indices = @transform_2, window_bounds = array<i64: 1, 12, 8>}, {transform_indices = @transform_3, window_bounds = array<i64: 1, 8, 16>}, {transform_indices = @transform_4, window_bounds = array<i64: 1, 12, 16>}]} {
    %c0 = arith.constant 0 : index
    %c0_0 = arith.constant 0 : index
    %c0_1 = arith.constant 0 : index
    %0 = vector.load %arg2[%c0, %c0_0, %c0_1] : memref<1x128x16xf32, #tpu.memory_space<vmem>>, vector<1x128x16xf32>
    %1 = vector.shape_cast %0 : vector<1x128x16xf32> to vector<128x16xf32>
    %c0_2 = arith.constant 0 : index
    %c0_3 = arith.constant 0 : index
    %c0_4 = arith.constant 0 : index
    %2 = vector.load %arg3[%c0_2, %c0_3, %c0_4] : memref<1x8x128xf32, #tpu.memory_space<vmem>>, vector<1x8x128xf32>
    %3 = vector.shape_cast %2 : vector<1x8x128xf32> to vector<8x128xf32>
    %cst = arith.constant dense<0.000000e+00> : vector<8x16xf32>
    %4 = tpu.matmul %3, %1, %cst {dimension_numbers = #tpu.dot_dimension_numbers<[1], [0], [0], [1], [0, 0, 1, 1], [], []>} : vector<8x128xf32>, vector<128x16xf32>, vector<8x16xf32> -> vector<8x16xf32>
    %cst_5 = arith.constant dense<0xFF800000> : vector<16xf32>
    %5 = vector.multi_reduction <maximumf>, %4, %cst_5 [0] : vector<8x16xf32> to vector<16xf32>
    %6 = vector.shape_cast %5 : vector<16xf32> to vector<1x16xf32>
    %7 = vector.broadcast %6 : vector<1x16xf32> to vector<8x16xf32>
    %8 = arith.subf %4, %7 : vector<8x16xf32>
    %9 = math.exp %8 : vector<8x16xf32>
    %cst_6 = arith.constant dense<0.000000e+00> : vector<16xf32>
    %10 = vector.multi_reduction <add>, %9, %cst_6 [0] : vector<8x16xf32> to vector<16xf32>
    %11 = vector.shape_cast %10 : vector<16xf32> to vector<1x16xf32>
    %12 = tpu.reciprocal %11 {approx = true} : vector<1x16xf32> -> vector<1x16xf32>
    %13 = arith.mulf %11, %12 : vector<1x16xf32>
    %cst_7 = arith.constant 2.000000e+00 : f32
    %14 = vector.broadcast %cst_7 : f32 to vector<1x16xf32>
    %15 = arith.subf %14, %13 : vector<1x16xf32>
    %16 = arith.mulf %12, %15 : vector<1x16xf32>
    %17 = vector.broadcast %16 : vector<1x16xf32> to vector<8x16xf32>
    %18 = arith.mulf %9, %17 : vector<8x16xf32>
    %c0_8 = arith.constant 0 : index
    %c0_9 = arith.constant 0 : index
    %c0_10 = arith.constant 0 : index
    %19 = vector.load %arg5[%c0_8, %c0_9, %c0_10] : memref<1x8x16xf32, #tpu.memory_space<vmem>>, vector<1x8x16xf32>
    %20 = vector.shape_cast %19 : vector<1x8x16xf32> to vector<8x16xf32>
    %21 = vector.shape_cast %18 : vector<8x16xf32> to vector<1x8x16xf32>
    tpu.vector_store %arg5[%c0_8, %c0_9, %c0_10], %21 {strides = array<i32>} : memref<1x8x16xf32, #tpu.memory_space<vmem>>, vector<1x8x16xf32>,
    %c0_11 = arith.constant 0 : index
    %c0_12 = arith.constant 0 : index
    %c0_13 = arith.constant 0 : index
    %22 = vector.load %arg4[%c0_11, %c0_12, %c0_13] : memref<1x12x8xf32, #tpu.memory_space<vmem>>, vector<1x12x8xf32>
    %23 = vector.shape_cast %22 : vector<1x12x8xf32> to vector<12x8xf32>
    %cst_14 = arith.constant dense<0.000000e+00> : vector<12x16xf32>
    %24 = tpu.matmul %23, %18, %cst_14 {dimension_numbers = #tpu.dot_dimension_numbers<[1], [0], [0], [1], [0, 0, 1, 1], [], []>} : vector<12x8xf32>, vector<8x16xf32>, vector<12x16xf32> -> vector<12x16xf32>
    %c0_15 = arith.constant 0 : index
    %c0_16 = arith.constant 0 : index
    %c0_17 = arith.constant 0 : index
    %25 = vector.load %arg6[%c0_15, %c0_16, %c0_17] : memref<1x12x16xf32, #tpu.memory_space<vmem>>, vector<1x12x16xf32>
    %26 = vector.shape_cast %25 : vector<1x12x16xf32> to vector<12x16xf32>
    %27 = vector.shape_cast %24 : vector<12x16xf32> to vector<1x12x16xf32>
    tpu.vector_store %arg6[%c0_15, %c0_16, %c0_17], %27 {strides = array<i32>} : memref<1x12x16xf32, #tpu.memory_space<vmem>>, vector<1x12x16xf32>,
    return
  }
  func.func @transform_0(%arg0: i32, %arg1: i32) -> (i32, i32, i32) {
    %c0_i32 = arith.constant 0 : i32
    %c0_i32_0 = arith.constant 0 : i32
    return %arg0, %c0_i32, %arg1 : i32, i32, i32
  }
  func.func @transform_1(%arg0: i32, %arg1: i32) -> (i32, i32, i32) {
    %c0_i32 = arith.constant 0 : i32
    %c0_i32_0 = arith.constant 0 : i32
    %c0_i32_1 = arith.constant 0 : i32
    return %arg0, %c0_i32, %c0_i32_0 : i32, i32, i32
  }
  func.func @transform_2(%arg0: i32, %arg1: i32) -> (i32, i32, i32) {
    %c0_i32 = arith.constant 0 : i32
    %c0_i32_0 = arith.constant 0 : i32
    %c0_i32_1 = arith.constant 0 : i32
    return %arg0, %c0_i32, %c0_i32_0 : i32, i32, i32
  }
  func.func @transform_3(%arg0: i32, %arg1: i32) -> (i32, i32, i32) {
    %c0_i32 = arith.constant 0 : i32
    %c0_i32_0 = arith.constant 0 : i32
    return %arg0, %c0_i32, %arg1 : i32, i32, i32
  }
  func.func @transform_4(%arg0: i32, %arg1: i32) -> (i32, i32, i32) {
    %c0_i32 = arith.constant 0 : i32
    %c0_i32_0 = arith.constant 0 : i32
    return %arg0, %c0_i32, %arg1 : i32, i32, i32
  }
}

</mosaic_0001>

<llo_original>
// kernel: tpu_custom_call.1
$region0: #{tpu_custom_call.1}
  #allocation0 [shape = 'u32[]', space=smem, size = 0x4, offset = 0x4, fixed_abs, tag = 'smem constant byte address 0x4 - core index']
  #allocation1 [shape = 'u32[144,128]{1,0:T(1,128)}', space=vmem, size = 0x12000, scoped, tag = 'internal scratch']
  %s0 = inlined_call_operand.vmem [shape: f32[2,128,16], index: 0, kind: input, shape index: {}]
  %s1 = inlined_call_operand.vmem [shape: f32[2,8,128], index: 1, kind: input, shape index: {}]
  %s2 = inlined_call_operand.vmem [shape: f32[2,12,8], index: 2, kind: input, shape index: {}]
  %s3 = inlined_call_operand.hbm [shape: f32[2,8,16], index: 3, kind: output, shape index: {0}]
  %s4 = inlined_call_operand.vmem [shape: f32[2,12,16], index: 4, kind: output, shape index: {1}]
  %5 = xla_tuple %s3, %s4
  %s6 = sld [smem:[#allocation0]]
  $region53: #{tpu_custom_call.1} parent=0
    _
  %s8 = ssub.s32 1, %s6
  %s9 = scalar_select 0, %s8, %s6
  $region1: #{tpu_custom_call.1} parent=0
    #allocation2 [shape = 'u8[8192]{0}', space=vmem, size = 0x2000, scoped, tag = 'output window, operand 0']
    #allocation3 [shape = 's32[2]{0}', space=sflag, size = 0x8, scoped, tag = 'scoped memory for tpu_custom_call.1']
    %10 = vsyncpa [#allocation3], 0
    %s11 = scalar_lea.sflag [#allocation3], 1
    %12 = vsyncpa %s11, 0
    loop: start=0, step=1, limit=4
    $region2: #{tpu_custom_call.1} parent=1 // loop_pre_header
      _
    $region3: #{tpu_custom_call.1} parent=1 // loop_header
      %s14 = sphi 0, %s18
      %p15 = scmp.ge.s32.totalorder %s14, 4
      %s21 = sphi 0, %s33
      %s22 = sphi 0, %s29
      %s23 = sphi 0, %s21
      %s24 = sphi 0, %s22
      %s25 = sphi 0, %s23
      %s26 = sphi 0, %s24
      %s38 = sphi 0, %s40
      %s41 = sphi 0, %s38
      %s42 = sphi 0, %s41
      %s58 = sphi 0, %s42
      %s64 = sphi 0, %s66
      %s67 = sphi 0, %s64
      %s68 = sphi 0, %s67
      %s84 = sphi 0, %s68
      %s90 = sphi 0, %s92
      %s93 = sphi 0, %s90
      %s94 = sphi 0, %s93
      %s110 = sphi 0, %s94
      %s118 = sphi 0, %s120
      %s121 = sphi 0, %s118
      %s122 = sphi 0, %s121
      %s138 = sphi 0, %s122
      %s146 = sphi 0, %s148
      %s149 = sphi 0, %s146
      %s150 = sphi 0, %s149
      %s166 = sphi 0, %s150
    $region4: #{tpu_custom_call.1} parent=1 // loop_header_branch
      %17 = sbr.rel (%p15) target = $region8
    $region5: #{tpu_custom_call.1} parent=1 // loop_body
      %s19 = ssub.s32 %s14, 1
      %s20 = ssub.s32 %s14, 2
      %s27 = sadd.s32 1, %s22
      %p28 = scmp.ge.s32.totalorder %s27, 1
      %s29 = scalar_select %p28, 0, %s27
      %s30 = sadd.s32 1, %s21
      %s31 = scalar_select %p28, %s30, %s21
      %p32 = scmp.ge.s32.totalorder %s31, 2
      %s33 = scalar_select %p32, 0, %s31
      %s34 = ssub.s32 %s21, %s33
      %s35 = ssub.s32 %s22, %s29
      %s36 = sor.u32 %s34, %s35
      %p37 = scmp.eq.s32.totalorder %s36, 0
      %s39 = sadd.s32 %s38, 1
      %s40 = scalar_select %p37, %s38, %s39
      %p43 = pneg %p37
      %p44 = scmp.eq.s32.totalorder %s14, 1
      %p45 = por %p43, %p44
      %p46 = scmp.ne.s32.totalorder %s38, %s41
      %p47 = scmp.eq.s32.totalorder %s14, 0
      %p48 = por %p46, %p47
      %p49 = scmp.ne.s32.totalorder %s38, %s41
      %p50 = scmp.eq.s32.totalorder %s19, 1
      %p51 = por %p49, %p50
      %p52 = scmp.ne.s32.totalorder %s41, %s42
      %p53 = scmp.eq.s32.totalorder %s19, 0
      %p54 = por %p52, %p53
      %p55 = scmp.ne.s32.totalorder %s41, %s42
      %p56 = scmp.eq.s32.totalorder %s20, 1
      %p57 = por %p55, %p56
      %p59 = scmp.ne.s32.totalorder %s42, %s58
      %p60 = scmp.eq.s32.totalorder %s20, 0
      %p61 = por %p59, %p60
      %s62 = ssub.s32 %s21, %s33
      %p63 = scmp.eq.s32.totalorder %s62, 0
      %s65 = sadd.s32 %s64, 1
      %s66 = scalar_select %p63, %s64, %s65
      %p69 = pneg %p63
      %p70 = scmp.eq.s32.totalorder %s14, 1
      %p71 = por %p69, %p70
      %p72 = scmp.ne.s32.totalorder %s64, %s67
      %p73 = scmp.eq.s32.totalorder %s14, 0
      %p74 = por %p72, %p73
      %p75 = scmp.ne.s32.totalorder %s64, %s67
      %p76 = scmp.eq.s32.totalorder %s19, 1
      %p77 = por %p75, %p76
      %p78 = scmp.ne.s32.totalorder %s67, %s68
      %p79 = scmp.eq.s32.totalorder %s19, 0
      %p80 = por %p78, %p79
      %p81 = scmp.ne.s32.totalorder %s67, %s68
      %p82 = scmp.eq.s32.totalorder %s20, 1
      %p83 = por %p81, %p82
      %p85 = scmp.ne.s32.totalorder %s68, %s84
      %p86 = scmp.eq.s32.totalorder %s20, 0
      %p87 = por %p85, %p86
      %s88 = ssub.s32 %s21, %s33
      %p89 = scmp.eq.s32.totalorder %s88, 0
      %s91 = sadd.s32 %s90, 1
      %s92 = scalar_select %p89, %s90, %s91
      %p95 = pneg %p89
      %p96 = scmp.eq.s32.totalorder %s14, 1
      %p97 = por %p95, %p96
      %p98 = scmp.ne.s32.totalorder %s90, %s93
      %p99 = scmp.eq.s32.totalorder %s14, 0
      %p100 = por %p98, %p99
      %p101 = scmp.ne.s32.totalorder %s90, %s93
      %p102 = scmp.eq.s32.totalorder %s19, 1
      %p103 = por %p101, %p102
      %p104 = scmp.ne.s32.totalorder %s93, %s94
      %p105 = scmp.eq.s32.totalorder %s19, 0
      %p106 = por %p104, %p105
      %p107 = scmp.ne.s32.totalorder %s93, %s94
      %p108 = scmp.eq.s32.totalorder %s20, 1
      %p109 = por %p107, %p108
      %p111 = scmp.ne.s32.totalorder %s94, %s110
      %p112 = scmp.eq.s32.totalorder %s20, 0
      %p113 = por %p111, %p112
      %s114 = ssub.s32 %s21, %s33
      %s115 = ssub.s32 %s22, %s29
      %s116 = sor.u32 %s114, %s115
      %p117 = scmp.eq.s32.totalorder %s116, 0
      %s119 = sadd.s32 %s118, 1
      %s120 = scalar_select %p117, %s118, %s119
      %p123 = pneg %p117
      %p124 = scmp.eq.s32.totalorder %s14, 1
      %p125 = por %p123, %p124
      %p126 = scmp.ne.s32.totalorder %s118, %s121
      %p127 = scmp.eq.s32.totalorder %s14, 0
      %p128 = por %p126, %p127
      %p129 = scmp.ne.s32.totalorder %s118, %s121
      %p130 = scmp.eq.s32.totalorder %s19, 1
      %p131 = por %p129, %p130
      %p132 = scmp.ne.s32.totalorder %s121, %s122
      %p133 = scmp.eq.s32.totalorder %s19, 0
      %p134 = por %p132, %p133
      %p135 = scmp.ne.s32.totalorder %s121, %s122
      %p136 = scmp.eq.s32.totalorder %s20, 1
      %p137 = por %p135, %p136
      %p139 = scmp.ne.s32.totalorder %s122, %s138
      %p140 = scmp.eq.s32.totalorder %s20, 0
      %p141 = por %p139, %p140
      %s142 = ssub.s32 %s21, %s33
      %s143 = ssub.s32 %s22, %s29
      %s144 = sor.u32 %s142, %s143
      %p145 = scmp.eq.s32.totalorder %s144, 0
      %s147 = sadd.s32 %s146, 1
      %s148 = scalar_select %p145, %s146, %s147
      %p151 = pneg %p145
      %p152 = scmp.eq.s32.totalorder %s14, 1
      %p153 = por %p151, %p152
      %p154 = scmp.ne.s32.totalorder %s146, %s149
      %p155 = scmp.eq.s32.totalorder %s14, 0
      %p156 = por %p154, %p155
      %p157 = scmp.ne.s32.totalorder %s146, %s149
      %p158 = scmp.eq.s32.totalorder %s19, 1
      %p159 = por %p157, %p158
      %p160 = scmp.ne.s32.totalorder %s149, %s150
      %p161 = scmp.eq.s32.totalorder %s19, 0
      %p162 = por %p160, %p161
      %p163 = scmp.ne.s32.totalorder %s149, %s150
      %p164 = scmp.eq.s32.totalorder %s20, 1
      %p165 = por %p163, %p164
      %p167 = scmp.ne.s32.totalorder %s150, %s166
      %p168 = scmp.eq.s32.totalorder %s20, 0
      %p169 = por %p167, %p168
      %p170 = scmp.le.s32.totalorder 1, %s14
      %p171 = scmp.lt.s32.totalorder %s14, 3
      %p172 = pnand %p170, %p171
      %p173 = pneg %p172
      // Predicated region
      $region9: #{tpu_custom_call.1} parent=5 // pred_check
        _
      $region10: #{tpu_custom_call.1} parent=5 // pred_check_branch
        %175 = sbr.rel (%p172) target = $region12
      $region11: #{tpu_custom_call.1} parent=5 // pred_region
        %s176 = ssub.s32 %s14, 1
      $region12: #{tpu_custom_call.1} parent=5 // pred_fallthru
        _
      %p177 = scmp.lt.s32.totalorder %s14, 2
      // Predicated region
      $region13: #{tpu_custom_call.1} parent=5 // pred_check
        %p178 = pneg %p177
      $region14: #{tpu_custom_call.1} parent=5 // pred_check_branch
        %180 = sbr.rel (%p178) target = $region16
      $region15: #{tpu_custom_call.1} parent=5 // pred_region
        // Predicated region
        $region17: #{tpu_custom_call.1} parent=15 // pred_check
          %p181 = pneg %p48
        $region18: #{tpu_custom_call.1} parent=15 // pred_check_branch
          %183 = sbr.rel (%p181) target = $region20
        $region19: #{tpu_custom_call.1} parent=15 // pred_region
          %p184 = scmp.lt.s32.totalorder %s21, 1
          %s185 = scalar_select %p184, %s21, 1
          %p186 = scmp.lt.s32.totalorder %s22, 0
          %s187 = scalar_select %p186, %s22, 0
          %s188 = smul.addr %s185, 16
          %s189 = sadd.s32 %s187, %s188
          %s190 = smul.addr %s189, 8
          %s191 = scalar_lea.vmem %s0, %s190
        $region20: #{tpu_custom_call.1} parent=15 // pred_fallthru
          _
        // Predicated region
        $region21: #{tpu_custom_call.1} parent=15 // pred_check
          %p192 = pneg %p74
        $region22: #{tpu_custom_call.1} parent=15 // pred_check_branch
          %194 = sbr.rel (%p192) target = $region24
        $region23: #{tpu_custom_call.1} parent=15 // pred_region
          %p195 = scmp.lt.s32.totalorder %s21, 1
          %s196 = scalar_select %p195, %s21, 1
          %s197 = smul.addr %s196, 8
          %s198 = scalar_lea.vmem %s1, %s197
        $region24: #{tpu_custom_call.1} parent=15 // pred_fallthru
          _
        // Predicated region
        $region25: #{tpu_custom_call.1} parent=15 // pred_check
          %p199 = pneg %p100
        $region26: #{tpu_custom_call.1} parent=15 // pred_check_branch
          %201 = sbr.rel (%p199) target = $region28
        $region27: #{tpu_custom_call.1} parent=15 // pred_region
          %p202 = scmp.lt.s32.totalorder %s21, 1
          %s203 = scalar_select %p202, %s21, 1
          %s204 = smul.addr %s203, 2
          %s205 = smul.addr %s204, 8
          %s206 = scalar_lea.vmem %s2, %s205
        $region28: #{tpu_custom_call.1} parent=15 // pred_fallthru
          _
      $region16: #{tpu_custom_call.1} parent=5 // pred_fallthru
        _
      %p207 = scmp.le.s32.totalorder 1, %s14
      %p208 = scmp.lt.s32.totalorder %s14, 3
      %p209 = pnand %p207, %p208
      %p210 = pneg %p209
      // Predicated region
      $region29: #{tpu_custom_call.1} parent=5 // pred_check
        _
      $region30: #{tpu_custom_call.1} parent=5 // pred_check_branch
        %212 = sbr.rel (%p209) target = $region32
      $region31: #{tpu_custom_call.1} parent=5 // pred_region
        %s213 = ssub.s32 %s14, 1
        %p214 = scmp.lt.s32.totalorder %s23, 1
        %s215 = scalar_select %p214, %s23, 1
        %p216 = scmp.lt.s32.totalorder %s24, 0
        %s217 = scalar_select %p216, %s24, 0
        %s218 = smul.addr %s215, 16
        %s219 = sadd.s32 %s217, %s218
        %s220 = smul.addr %s219, 8
        %s221 = scalar_lea.vmem %s0, %s220
        %p222 = pneg %p54
        %p223 = pneg %p51
        %p224 = scmp.lt.s32.totalorder %s23, 1
        %s225 = scalar_select %p224, %s23, 1
        %s226 = smul.addr %s225, 8
        %s227 = scalar_lea.vmem %s1, %s226
        %p228 = pneg %p80
        %p229 = pneg %p77
        %p230 = scmp.lt.s32.totalorder %s23, 1
        %s231 = scalar_select %p230, %s23, 1
        %s232 = smul.addr %s231, 2
        %s233 = smul.addr %s232, 8
        %s234 = scalar_lea.vmem %s2, %s233
        %p235 = pneg %p106
        %p236 = pneg %p103
        %p237 = pneg %p134
        %p238 = pneg %p131
        %s239 = sand.u32 %s121, 1
        %s240 = scalar_lea.sflag [#allocation3], %s239
        %s241 = sand.u32 %s121, 1
        %s242 = smul.addr %s241, 8
        %s243 = scalar_lea.vmem [#allocation2], %s242
        %p244 = pneg %p162
        %p245 = pneg %p159
        %p246 = scmp.lt.s32.totalorder %s23, 1
        %s247 = scalar_select %p246, %s23, 1
        %p248 = scmp.lt.s32.totalorder %s24, 0
        %s249 = scalar_select %p248, %s24, 0
        %s250 = smul.addr %s247, 2
        %s251 = sadd.s32 %s249, %s250
        %s252 = smul.addr %s251, 8
        %s253 = scalar_lea.vmem %s4, %s252
        %p254 = scmp.lt.s32.totalorder %s23, 1
        %s255 = scalar_select %p254, %s23, 1
        %p256 = scmp.lt.s32.totalorder %s24, 0
        %s257 = scalar_select %p256, %s24, 0
        %s258 = smul.addr %s255, 16
        %s259 = sadd.s32 %s257, %s258
        %s260 = smul.addr %s259, 8
        %s261 = scalar_lea.vmem %s0, %s260
        %p262 = scmp.lt.s32.totalorder %s23, 1
        %s263 = scalar_select %p262, %s23, 1
        %s264 = smul.addr %s263, 8
        %s265 = scalar_lea.vmem %s1, %s264
        %p266 = scmp.lt.s32.totalorder %s23, 1
        %s267 = scalar_select %p266, %s23, 1
        %s268 = smul.addr %s267, 2
        %s269 = smul.addr %s268, 8
        %s270 = scalar_lea.vmem %s2, %s269
        %p271 = scmp.lt.s32.totalorder %s23, 1
        %s272 = scalar_select %p271, %s23, 1
        %p273 = scmp.lt.s32.totalorder %s24, 0
        %s274 = scalar_select %p273, %s24, 0
        %s275 = smul.addr %s272, 2
        %s276 = sadd.s32 %s274, %s275
        %s277 = smul.addr %s276, 8
        %s278 = scalar_lea.vmem %s4, %s277
        %v279 = vld [vmem:[%s261] sm:$0xff]
        %v280 = vld [vmem:[%s261 + $0x8] sm:$0xff]
        %v281 = vld [vmem:[%s261 + $0x10] sm:$0xff]
        %v282 = vld [vmem:[%s261 + $0x18] sm:$0xff]
        %v283 = vld [vmem:[%s261 + $0x20] sm:$0xff]
        %v284 = vld [vmem:[%s261 + $0x28] sm:$0xff]
        %v285 = vld [vmem:[%s261 + $0x30] sm:$0xff]
        %v286 = vld [vmem:[%s261 + $0x38] sm:$0xff]
        %v287 = vld [vmem:[%s261 + $0x40] sm:$0xff]
        %v288 = vld [vmem:[%s261 + $0x48] sm:$0xff]
        %v289 = vld [vmem:[%s261 + $0x50] sm:$0xff]
        %v290 = vld [vmem:[%s261 + $0x58] sm:$0xff]
        %v291 = vld [vmem:[%s261 + $0x60] sm:$0xff]
        %v292 = vld [vmem:[%s261 + $0x68] sm:$0xff]
        %v293 = vld [vmem:[%s261 + $0x70] sm:$0xff]
        %v294 = vld [vmem:[%s261 + $0x78] sm:$0xff]
        %v295 = vld [vmem:[%s265] sm:$0xff]
        %296 = vmatprep.subr.mxu0 0.0
        %297 = vmatpush1.msra.mxu0 %v294
        %298 = vmatprep.subr.mxu0 0.0
        %299 = vmatpush1.msra.mxu0 %v293
        %300 = vmatprep.subr.mxu0 0.0
        %301 = vmatpush1.msra.mxu0 %v292
        %302 = vmatprep.subr.mxu0 0.0
        %303 = vmatpush1.msra.mxu0 %v291
        %304 = vmatprep.subr.mxu0 0.0
        %305 = vmatpush1.msra.mxu0 %v290
        %306 = vmatprep.subr.mxu0 0.0
        %307 = vmatpush1.msra.mxu0 %v289
        %308 = vmatprep.subr.mxu0 0.0
        %309 = vmatpush1.msra.mxu0 %v288
        %310 = vmatprep.subr.mxu0 0.0
        %311 = vmatpush1.msra.mxu0 %v287
        %312 = vmatprep.subr.mxu0 0.0
        %313 = vmatpush1.msra.mxu0 %v286
        %314 = vmatprep.subr.mxu0 0.0
        %315 = vmatpush1.msra.mxu0 %v285
        %316 = vmatprep.subr.mxu0 0.0
        %317 = vmatpush1.msra.mxu0 %v284
        %318 = vmatprep.subr.mxu0 0.0
        %319 = vmatpush1.msra.mxu0 %v283
        %320 = vmatprep.subr.mxu0 0.0
        %321 = vmatpush1.msra.mxu0 %v282
        %322 = vmatprep.subr.mxu0 0.0
        %323 = vmatpush1.msra.mxu0 %v281
        %324 = vmatprep.subr.mxu0 0.0
        %325 = vmatpush1.msra.mxu0 %v280
        %326 = vmatprep.subr.mxu0 0.0
        %327 = vmatpush1.msra.mxu0 %v279
        %328 = vmatprep.subr.mxu0 0.0
        %329 = vmatpush2.msra.mxu0 0.0
        %330 = vmatprep.subr.mxu0 0.0
        %331 = vmatpush2.msra.mxu0 0.0
        %332 = vmatprep.subr.mxu0 0.0
        %333 = vmatpush2.msra.mxu0 0.0
        %334 = vmatprep.subr.mxu0 0.0
        %335 = vmatpush2.msra.mxu0 0.0
        %336 = vmatprep.subr.mxu0 0.0
        %337 = vmatpush2.msra.mxu0 0.0
        %338 = vmatprep.subr.mxu0 0.0
        %339 = vmatpush2.msra.mxu0 0.0
        %340 = vmatprep.subr.mxu0 0.0
        %341 = vmatpush2.msra.mxu0 0.0
        %342 = vmatprep.subr.mxu0 0.0
        %343 = vmatpush2.msra.mxu0 0.0
        %344 = vmatprep.subr.mxu0 0.0
        %345 = vmatpush2.msra.mxu0 0.0
        %346 = vmatprep.subr.mxu0 0.0
        %347 = vmatpush2.msra.mxu0 0.0
        %348 = vmatprep.subr.mxu0 0.0
        %349 = vmatpush2.msra.mxu0 0.0
        %350 = vmatprep.subr.mxu0 0.0
        %351 = vmatpush2.msra.mxu0 0.0
        %352 = vmatprep.subr.mxu0 0.0
        %353 = vmatpush2.msra.mxu0 0.0
        %354 = vmatprep.subr.mxu0 0.0
        %355 = vmatpush2.msra.mxu0 0.0
        %356 = vmatprep.subr.mxu0 0.0
        %357 = vmatpush2.msra.mxu0 0.0
        %358 = vmatprep.subr.mxu0 0.0
        %359 = vmatpush2.msra.mxu0 0.0
        %360 = vmatprep.mubr.f32.mxu0 0.0
        %361 = vmatmul.mubr.f32.gmra.mxu0 %v295
        %v362 = vpop.f32.mrf.mxu0
        %v363 = vadd.f32 0.0, %v362
        %v364 = vpop.f32.mrf.mxu0
        %365 = vdwg.mxu0
        %vm366 = vcmask 130048
        %v367 = vsel %vm366, %v363, -inf
        %v368 = vrot.slane %v367, 4
        %v369 = vmax.f32 %v367, %v368
        %v370 = vrot.slane %v369, 2
        %v371 = vmax.f32 %v369, %v370
        %v372 = vrot.slane %v371, 1
        %v373 = vmax.f32 %v371, %v372
        %v374 = vsub.f32 %v363, %v373
        %v375 = vmul.f32 %v374, 1.442695
        %v376 = vpow.pop %v375
        %v377 = vsel %vm366, %v376, 0.0
        %v378 = vrot.slane %v377, 4
        %v379 = vadd.f32 %v377, %v378
        %v380 = vrot.slane %v379, 2
        %v381 = vadd.f32 %v379, %v380
        %v382 = vrot.slane %v381, 1
        %v383 = vadd.f32 %v381, %v382
        %v384 = vrcp.pop %v383
        %v385 = vmul.f32 %v383, %v384
        %v386 = vsub.f32 2.0, %v385
        %v387 = vmul.f32 %v384, %v386
        %v388 = vmul.f32 %v376, %v387
        %389 = vst.msk [vmem:[%s243] sm:$0xff] %vm366, %v388
        %v390 = vld [vmem:[%s270] sm:$0xff]
        %v391 = vld [vmem:[%s270 + $0x8] sm:$0xf]
        %vm392 = vcmask 64512
        %v394 = vsel %vm392, %v390, 0
        %v397 = vsel %vm392, %v391, 0
        %399 = vmatprep.subr.mxu0 0.0
        %400 = vmatpush1.msra.mxu0 0.0
        %401 = vmatprep.subr.mxu0 0.0
        %402 = vmatpush1.msra.mxu0 0.0
        %403 = vmatprep.subr.mxu0 0.0
        %404 = vmatpush1.msra.mxu0 0.0
        %405 = vmatprep.subr.mxu0 0.0
        %406 = vmatpush1.msra.mxu0 0.0
        %407 = vmatprep.subr.mxu0 0.0
        %408 = vmatpush1.msra.mxu0 0.0
        %409 = vmatprep.subr.mxu0 0.0
        %410 = vmatpush1.msra.mxu0 0.0
        %411 = vmatprep.subr.mxu0 0.0
        %412 = vmatpush1.msra.mxu0 0.0
        %413 = vmatprep.subr.mxu0 0.0
        %414 = vmatpush1.msra.mxu0 0.0
        %415 = vmatprep.subr.mxu0 0.0
        %416 = vmatpush1.msra.mxu0 0.0
        %417 = vmatprep.subr.mxu0 0.0
        %418 = vmatpush1.msra.mxu0 0.0
        %419 = vmatprep.subr.mxu0 0.0
        %420 = vmatpush1.msra.mxu0 0.0
        %421 = vmatprep.subr.mxu0 0.0
        %422 = vmatpush1.msra.mxu0 0.0
        %423 = vmatprep.subr.mxu0 0.0
        %424 = vmatpush1.msra.mxu0 0.0
        %425 = vmatprep.subr.mxu0 0.0
        %426 = vmatpush1.msra.mxu0 0.0
        %427 = vmatprep.subr.mxu0 0.0
        %428 = vmatpush1.msra.mxu0 0.0
        %429 = vmatprep.subr.mxu0 0.0
        %430 = vmatpush1.msra.mxu0 %v388
        %431 = vmatprep.subr.mxu0 0.0
        %432 = vmatpush2.msra.mxu0 0.0
        %433 = vmatprep.subr.mxu0 0.0
        %434 = vmatpush2.msra.mxu0 0.0
        %435 = vmatprep.subr.mxu0 0.0
        %436 = vmatpush2.msra.mxu0 0.0
        %437 = vmatprep.subr.mxu0 0.0
        %438 = vmatpush2.msra.mxu0 0.0
        %439 = vmatprep.subr.mxu0 0.0
        %440 = vmatpush2.msra.mxu0 0.0
        %441 = vmatprep.subr.mxu0 0.0
        %442 = vmatpush2.msra.mxu0 0.0
        %443 = vmatprep.subr.mxu0 0.0
        %444 = vmatpush2.msra.mxu0 0.0
        %445 = vmatprep.subr.mxu0 0.0
        %446 = vmatpush2.msra.mxu0 0.0
        %447 = vmatprep.subr.mxu0 0.0
        %448 = vmatpush2.msra.mxu0 0.0
        %449 = vmatprep.subr.mxu0 0.0
        %450 = vmatpush2.msra.mxu0 0.0
        %451 = vmatprep.subr.mxu0 0.0
        %452 = vmatpush2.msra.mxu0 0.0
        %453 = vmatprep.subr.mxu0 0.0
        %454 = vmatpush2.msra.mxu0 0.0
        %455 = vmatprep.subr.mxu0 0.0
        %456 = vmatpush2.msra.mxu0 0.0
        %457 = vmatprep.subr.mxu0 0.0
        %458 = vmatpush2.msra.mxu0 0.0
        %459 = vmatprep.subr.mxu0 0.0
        %460 = vmatpush2.msra.mxu0 0.0
        %461 = vmatprep.subr.mxu0 0.0
        %462 = vmatpush2.msra.mxu0 0.0
        %463 = vmatprep.mubr.f32.mxu0 0.0
        %464 = vmatmul.mubr.f32.gmra.mxu0 %v394
        %v465 = vpop.f32.mrf.mxu0
        %v466 = vadd.f32 0.0, %v465
        %v467 = vpop.f32.mrf.mxu0
        %468 = vmatprep.mubr.f32.mxu0 0.0
        %469 = vmatmul.mubr.f32.gmra.mxu0 %v397
        %v470 = vpop.f32.mrf.mxu0
        %v471 = vadd.f32 0.0, %v470
        %v472 = vpop.f32.mrf.mxu0
        %473 = vdwg.mxu0
        %474 = vst.msk [vmem:[%s278] sm:$0xff] %vm366, %v466
        %vm475 = vcmask 125952
        %476 = vst.msk [vmem:[%s278 + $0x8] sm:$0xf] %vm475, %v471
        %s477 = sand.u32 %s121, 1
        %s478 = scalar_lea.sflag [#allocation3], %s477
        %s479 = sand.u32 %s121, 1
        %s480 = smul.addr %s479, 8
        %s481 = scalar_lea.vmem [#allocation2], %s480
        %p482 = scmp.lt.s32.totalorder %s23, 1
        %s483 = scalar_select %p482, %s23, 1
        %p484 = scmp.lt.s32.totalorder %s24, 0
        %s485 = scalar_select %p484, %s24, 0
        %s486 = smul.addr %s483, 2
        %s487 = sadd.s32 %s485, %s486
        %s488 = smul.addr %s487, 8
        %s489 = scalar_lea.vmem %s4, %s488
        // Predicated region
        $region33: #{tpu_custom_call.1} parent=31 // pred_check
          %p490 = pneg %p131
        $region34: #{tpu_custom_call.1} parent=31 // pred_check_branch
          %492 = sbr.rel (%p490) target = $region36
        $region35: #{tpu_custom_call.1} parent=31 // pred_region
          %s494 = ssub.s32 128, 128
          %495 = vsyncadd %s478, %s494
          %s496 = sadd.s32 %s24, %s23
          %s497 = smul.addr %s496, 128
          %s498 = scalar_lea.hbm %s3, %s497
          %s500 = sshll.u32 %s481, 4
          %s501 = int_to_ptr.vmem [resolvable:$true] %s500
          %503 = dma.vmem_to_hbm [thread:$0]  %s501, 128, %s498, %s478
        $region36: #{tpu_custom_call.1} parent=31 // pred_fallthru
          _
        // Predicated region
        $region37: #{tpu_custom_call.1} parent=31 // pred_check
          %p504 = pneg %p159
        $region38: #{tpu_custom_call.1} parent=31 // pred_check_branch
          %506 = sbr.rel (%p504) target = $region40
        $region39: #{tpu_custom_call.1} parent=31 // pred_region
          _
        $region40: #{tpu_custom_call.1} parent=31 // pred_fallthru
          _
      $region32: #{tpu_custom_call.1} parent=5 // pred_fallthru
        _
      %p507 = scmp.le.s32.totalorder 2, %s14
      // Predicated region
      $region41: #{tpu_custom_call.1} parent=5 // pred_check
        %p508 = pneg %p507
      $region42: #{tpu_custom_call.1} parent=5 // pred_check_branch
        %510 = sbr.rel (%p508) target = $region44
      $region43: #{tpu_custom_call.1} parent=5 // pred_region
        %s511 = ssub.s32 %s14, 2
        // Predicated region
        $region45: #{tpu_custom_call.1} parent=43 // pred_check
          %p512 = pneg %p137
        $region46: #{tpu_custom_call.1} parent=43 // pred_check_branch
          %514 = sbr.rel (%p512) target = $region48
        $region47: #{tpu_custom_call.1} parent=43 // pred_region
          %s515 = sand.u32 %s122, 1
          %s516 = scalar_lea.sflag [#allocation3], %s515
          %s517 = sand.u32 %s122, 1
          %s518 = smul.addr %s517, 8
          %s519 = scalar_lea.vmem [#allocation2], %s518
          %520 = dma.done %s516, 128
        $region48: #{tpu_custom_call.1} parent=43 // pred_fallthru
          _
        // Predicated region
        $region49: #{tpu_custom_call.1} parent=43 // pred_check
          %p521 = pneg %p165
        $region50: #{tpu_custom_call.1} parent=43 // pred_check_branch
          %523 = sbr.rel (%p521) target = $region52
        $region51: #{tpu_custom_call.1} parent=43 // pred_region
          %p524 = scmp.lt.s32.totalorder %s25, 1
          %s525 = scalar_select %p524, %s25, 1
          %p526 = scmp.lt.s32.totalorder %s26, 0
          %s527 = scalar_select %p526, %s26, 0
          %s528 = smul.addr %s525, 2
          %s529 = sadd.s32 %s527, %s528
          %s530 = smul.addr %s529, 8
          %s531 = scalar_lea.vmem %s4, %s530
        $region52: #{tpu_custom_call.1} parent=43 // pred_fallthru
          _
      $region44: #{tpu_custom_call.1} parent=5 // pred_fallthru
        _
    $region6: #{tpu_custom_call.1} parent=1 // loop_footer
      %s18 = sadd.s32 1, %s14
    $region7: #{tpu_custom_call.1} parent=1 // loop_footer_branch
      %13 = sbr.rel target = $region3
    $region8: #{tpu_custom_call.1} parent=1 // loop_exit
      _
    %532 = vsyncpa [#allocation3], 1
    %s533 = scalar_lea.sflag [#allocation3], 1
    %534 = vsyncpa %s533, 1

</llo_original>
